<compile_context>
chip_gen: v5e
topology: v5e:2x2
jax: 0.10.0
libtpu: 0.0.40
codegen_flags: <defaults>
</compile_context>

<pallas_src>
import jax
import jax.numpy as jnp
from jax.experimental import pallas as pl
from jax.experimental.pallas import tpu as pltpu


def _round_up(x, m):
    return ((x + m - 1) // m) * m


def _mlp_decoder_kernel(hs_ref, hd_ref,
                        w1_ref, b1_ref, w2_ref, b2_ref, w3_ref, b3_ref,
                        o_ref):
    # hs/hd: (in_size, tile_e) bf16 -- edges on the lane axis, features on
    # sublanes.  Elementwise endpoint product on the VPU in f32.
    x = hs_ref[...].astype(jnp.float32) * hd_ref[...].astype(jnp.float32)

    # Linear(in_size, hid) + ReLU : (hid_p, in_size) @ (in_size, tile_e) on MXU.
    h1 = jnp.dot(w1_ref[...], x.astype(jnp.bfloat16),
                 preferred_element_type=jnp.float32)
    h1 = jnp.maximum(h1 + b1_ref[...], 0.0)          # (hid_p, 1) lane-broadcast

    # Linear(hid, hid) + ReLU : (hid_p, hid_p) @ (hid_p, tile_e) on MXU.
    h2 = jnp.dot(w2_ref[...], h1.astype(jnp.bfloat16),
                 preferred_element_type=jnp.float32)
    h2 = jnp.maximum(h2 + b2_ref[...], 0.0)

    # Linear(hid, 1): sublane reduction -> already lane-dense (1, tile_e) row.
    out = jnp.sum(h2 * w3_ref[...], axis=0, keepdims=True) + b3_ref[0, 0]
    o_ref[...] = out.astype(o_ref.dtype)


def mlp_predictor_pallas(h_src, h_dst, params, *, tile_e=1024):
    """predictor(h_src * h_dst) with a Pallas kernel. h_src/h_dst: (E, in_size)."""
    w1, b1, w2, b2, w3, b3 = params
    E, in_size = h_src.shape
    hid = w1.shape[1]

    # --- pad hidden dim to a multiple of 128 (dense MXU lanes / vregs).
    hid_p = _round_up(hid, 128)
    w1t = jnp.zeros((hid_p, in_size), jnp.bfloat16).at[:hid, :].set(
        w1.T.astype(jnp.bfloat16))
    w2t = jnp.zeros((hid_p, hid_p), jnp.bfloat16).at[:hid, :hid].set(
        w2.T.astype(jnp.bfloat16))
    b1c = jnp.zeros((hid_p, 1), jnp.float32).at[:hid, 0].set(b1.astype(jnp.float32))
    b2c = jnp.zeros((hid_p, 1), jnp.float32).at[:hid, 0].set(b2.astype(jnp.float32))
    w3c = jnp.zeros((hid_p, 1), jnp.float32).at[:hid, 0].set(
        w3[:, 0].astype(jnp.float32))
    b3s = jnp.reshape(b3, (1, 1)).astype(jnp.float32)   # scalar, lives in SMEM

    # --- edge tile: large (amortises per-step overhead), multiple of 128
    #     (lane-dense output / dense bf16 vregs), no bigger than needed.
    tile_e = max(128, min(int(tile_e), _round_up(E, 128)))
    tile_e = _round_up(tile_e, 128)
    E_pad = _round_up(E, tile_e)
    num_tiles = E_pad // tile_e

    # edges on the lane axis: (in_size, E_pad), bf16 (halves HBM bytes of the
    # largest tensors).  Padded edge columns are zero -> harmless.
    hs = h_src.astype(jnp.bfloat16).T
    hd = h_dst.astype(jnp.bfloat16).T
    if E_pad != E:
        hs = jnp.pad(hs, ((0, 0), (0, E_pad - E)))
        hd = jnp.pad(hd, ((0, 0), (0, E_pad - E)))

    # --- VMEM hint: double-buffered inputs/outputs/weights + f32 intermediates.
    est = (2 * 2 * in_size * tile_e * 2            # edge tiles (bf16, 2 bufs each)
           + 2 * (w1t.size + w2t.size) * 2         # bf16 weights (2 bufs)
           + 2 * 3 * hid_p * 4                     # f32 bias / w3 columns
           + 2 * tile_e * 4                        # output row (2 bufs)
           + (2 * hid_p + in_size) * tile_e * 4)   # h1/h2/x f32 intermediates
    vmem_limit = int(min(max(2 * est, 32 * 2**20), 48 * 2**20))

    full = lambda i: (0, 0)   # grid-invariant weights / biases

    out = pl.pallas_call(
        _mlp_decoder_kernel,
        out_shape=jax.ShapeDtypeStruct((1, E_pad), jnp.float32),
        grid_spec=pltpu.PrefetchScalarGridSpec(
            num_scalar_prefetch=0,
            grid=(num_tiles,),
            in_specs=[
                pl.BlockSpec((in_size, tile_e), lambda i: (0, i)),   # h_src tile
                pl.BlockSpec((in_size, tile_e), lambda i: (0, i)),   # h_dst tile
                pl.BlockSpec((hid_p, in_size), full),                # W1^T (bf16)
                pl.BlockSpec((hid_p, 1), full),                      # b1 (f32 col)
                pl.BlockSpec((hid_p, hid_p), full),                  # W2^T (bf16)
                pl.BlockSpec((hid_p, 1), full),                      # b2 (f32 col)
                pl.BlockSpec((hid_p, 1), full),                      # w3 (f32 col)
                pl.BlockSpec(memory_space=pltpu.MemorySpace.SMEM),   # b3 scalar
            ],
            out_specs=pl.BlockSpec((1, tile_e), lambda i: (0, i)),
        ),
        compiler_params=pltpu.CompilerParams(
            dimension_semantics=("parallel",),
            vmem_limit_bytes=vmem_limit),
    )(hs, hd, w1t, b1c, w2t, b2c, w3c, b3s)

    # lane-dense row -> (E, 1); padded columns sliced off.
    return out[0, :E, None]


def mlp_decoder_forward(pos_edges, neg_edges, x, params, *, tile_e=1024):
    """JAX equivalent of MLPDecoder.forward.

    pos_edges / neg_edges: (src_idx, dst_idx) int arrays of shape (E,).
    x: node features (N, in_size).
    Returns (h_pos, h_neg), each (E, 1).
    """
    pos_src, pos_dst = pos_edges
    neg_src, neg_dst = neg_edges
    E_pos = pos_src.shape[0]
    E_neg = neg_src.shape[0]

    # fuse pos + neg batches into a single kernel launch (shared weight DMA).
    src = jnp.concatenate([pos_src, neg_src])
    dst = jnp.concatenate([pos_dst, neg_dst])

    # TODO(synk): move this gather into the kernel (scalar-prefetched indices).
    h_all = mlp_predictor_pallas(x[src], x[dst], params, tile_e=tile_e)
    return h_all[:E_pos], h_all[E_pos:E_pos + E_neg]


def _init_params(key, in_size, hid_size):
    """Deterministic synthetic init matching nn.Linear shapes (weights stored
    transposed vs. torch, i.e. (fan_in, fan_out))."""
    ks = jax.random.split(key, 6)

    def lin(kw, kb, fan_in, fan_out):
        bound = 1.0 / (fan_in ** 0.5)
        w = jax.random.uniform(kw, (fan_in, fan_out), jnp.float32, -bound, bound)
        b = jax.random.uniform(kb, (fan_out,), jnp.float32, -bound, bound)
        return w, b

    w1, b1 = lin(ks[0], ks[1], in_size, hid_size)
    w2, b2 = lin(ks[2], ks[3], hid_size, hid_size)
    w3, b3 = lin(ks[4], ks[5], hid_size, 1)
    return (w1, b1, w2, b2, w3, b3)


def _reference_bf16(h_src, h_dst, params):
    """Mirrors the kernel's bf16-matmul / f32-accumulate numerics."""
    w1, b1, w2, b2, w3, b3 = params
    x = (h_src.astype(jnp.bfloat16).astype(jnp.float32)
         * h_dst.astype(jnp.bfloat16).astype(jnp.float32))
    h1 = jnp.maximum(jnp.dot(x.astype(jnp.bfloat16), w1.astype(jnp.bfloat16),
                             preferred_element_type=jnp.float32) + b1, 0.0)
    h2 = jnp.maximum(jnp.dot(h1.astype(jnp.bfloat16), w2.astype(jnp.bfloat16),
                             preferred_element_type=jnp.float32) + b2, 0.0)
    return h2 @ w3 + b3


def _reference_f32(h_src, h_dst, params):
    w1, b1, w2, b2, w3, b3 = params
    x = h_src * h_dst
    h1 = jnp.maximum(x @ w1 + b1, 0.0)
    h2 = jnp.maximum(h1 @ w2 + b2, 0.0)
    return h2 @ w3 + b3


if __name__ == "__main__":
    key = jax.random.PRNGKey(0)
    k_feat, k_param, k_e1, k_e2, k_e3, k_e4 = jax.random.split(key, 6)

    N = 64          # number of graph nodes
    in_size = 32    # input feature size
    hid_size = 32   # hidden size
    E = 200         # edges per graph (pos / neg); not a tile multiple -> tests padding

    x = jax.random.normal(k_feat, (N, in_size), jnp.float32)
    params = _init_params(k_param, in_size, hid_size)

    pos_src = jax.random.randint(k_e1, (E,), 0, N)
    pos_dst = jax.random.randint(k_e2, (E,), 0, N)
    neg_src = jax.random.randint(k_e3, (E,), 0, N)
    neg_dst = jax.random.randint(k_e4, (E,), 0, N)

    # tile_e=256 -> fused pos+neg batch (400 edges, padded to 512) runs as a
    # 2-step grid: exercises multi-tile indexing + column padding.
    h_pos, h_neg = mlp_decoder_forward((pos_src, pos_dst), (neg_src, neg_dst),
                                       x, params, tile_e=256)
    jax.block_until_ready((h_pos, h_neg))

    ref_pos = _reference_bf16(x[pos_src], x[pos_dst], params)
    ref_neg = _reference_bf16(x[neg_src], x[neg_dst], params)
    ref_pos_f32 = _reference_f32(x[pos_src], x[pos_dst], params)
    ref_neg_f32 = _reference_f32(x[neg_src], x[neg_dst], params)

    assert h_pos.shape == (E, 1) and h_neg.shape == (E, 1)
    assert jnp.allclose(h_pos, ref_pos, atol=1e-2, rtol=1e-2), \
        float(jnp.max(jnp.abs(h_pos - ref_pos)))
    assert jnp.allclose(h_neg, ref_neg, atol=1e-2, rtol=1e-2), \
        float(jnp.max(jnp.abs(h_neg - ref_neg)))
    # loose sanity check against the pure-f32 reference (bf16 quantisation error)
    assert jnp.allclose(h_pos, ref_pos_f32, atol=8e-2, rtol=8e-2)
    assert jnp.allclose(h_neg, ref_neg_f32, atol=8e-2, rtol=8e-2)

    print("KERNEL_OK")
</pallas_src>

<mosaic_0001>
module attributes {stable_mosaic.version = 11 : i64} {
  func.func @_mlp_decoder_kernel(%arg0: i32, %arg1: memref<32x256xbf16, #tpu.memory_space<vmem>>, %arg2: memref<32x256xbf16, #tpu.memory_space<vmem>>, %arg3: memref<128x32xbf16, #tpu.memory_space<vmem>>, %arg4: memref<128x1xf32, #tpu.memory_space<vmem>>, %arg5: memref<128x128xbf16, #tpu.memory_space<vmem>>, %arg6: memref<128x1xf32, #tpu.memory_space<vmem>>, %arg7: memref<128x1xf32, #tpu.memory_space<vmem>>, %arg8: memref<1x1xf32, #tpu.memory_space<smem>>, %arg9: memref<1x256xf32, #tpu.memory_space<vmem>>) attributes {dimension_semantics = [#tpu.dimension_semantics<parallel>], iteration_bounds = array<i64: 2>, scalar_prefetch = 0 : i64, scratch_operands = 0 : i64, tpu.core_type = #tpu.core_type<tc>, window_params = [{transform_indices = @transform_0, window_bounds = array<i64: 32, 256>}, {transform_indices = @transform_1, window_bounds = array<i64: 32, 256>}, {pipeline_mode = #tpu.pipeline_mode<synchronous>, transform_indices = @transform_2, window_bounds = array<i64: 128, 32>}, {pipeline_mode = #tpu.pipeline_mode<synchronous>, transform_indices = @transform_3, window_bounds = array<i64: 128, 1>}, {pipeline_mode = #tpu.pipeline_mode<synchronous>, transform_indices = @transform_4, window_bounds = array<i64: 128, 128>}, {pipeline_mode = #tpu.pipeline_mode<synchronous>, transform_indices = @transform_5, window_bounds = array<i64: 128, 1>}, {pipeline_mode = #tpu.pipeline_mode<synchronous>, transform_indices = @transform_6, window_bounds = array<i64: 128, 1>}, {transform_indices = @transform_7, window_bounds = array<i64: 1, 1>}, {transform_indices = @transform_8, window_bounds = array<i64: 1, 256>}]} {
    %c0 = arith.constant 0 : index
    %c0_0 = arith.constant 0 : index
    %0 = vector.load %arg1[%c0, %c0_0] : memref<32x256xbf16, #tpu.memory_space<vmem>>, vector<32x256xbf16>
    %1 = arith.extf %0 : vector<32x256xbf16> to vector<32x256xf32>
    %c0_1 = arith.constant 0 : index
    %c0_2 = arith.constant 0 : index
    %2 = vector.load %arg2[%c0_1, %c0_2] : memref<32x256xbf16, #tpu.memory_space<vmem>>, vector<32x256xbf16>
    %3 = arith.extf %2 : vector<32x256xbf16> to vector<32x256xf32>
    %4 = arith.mulf %1, %3 : vector<32x256xf32>
    %c0_3 = arith.constant 0 : index
    %c0_4 = arith.constant 0 : index
    %5 = vector.load %arg3[%c0_3, %c0_4] : memref<128x32xbf16, #tpu.memory_space<vmem>>, vector<128x32xbf16>
    %6 = arith.truncf %4 : vector<32x256xf32> to vector<32x256xbf16>
    %cst = arith.constant dense<0.000000e+00> : vector<128x256xf32>
    %7 = tpu.matmul %5, %6, %cst {dimension_numbers = #tpu.dot_dimension_numbers<[1], [0], [0], [1], [0, 0, 1, 1], [], []>} : vector<128x32xbf16>, vector<32x256xbf16>, vector<128x256xf32> -> vector<128x256xf32>
    %c0_5 = arith.constant 0 : index
    %c0_6 = arith.constant 0 : index
    %8 = vector.load %arg4[%c0_5, %c0_6] : memref<128x1xf32, #tpu.memory_space<vmem>>, vector<128x1xf32>
    %9 = vector.broadcast %8 : vector<128x1xf32> to vector<128x256xf32>
    %10 = arith.addf %7, %9 : vector<128x256xf32>
    %cst_7 = arith.constant 0.000000e+00 : f32
    %11 = vector.broadcast %cst_7 : f32 to vector<128x256xf32>
    %12 = arith.maximumf %10, %11 : vector<128x256xf32>
    %c0_8 = arith.constant 0 : index
    %c0_9 = arith.constant 0 : index
    %13 = vector.load %arg5[%c0_8, %c0_9] : memref<128x128xbf16, #tpu.memory_space<vmem>>, vector<128x128xbf16>
    %14 = arith.truncf %12 : vector<128x256xf32> to vector<128x256xbf16>
    %cst_10 = arith.constant dense<0.000000e+00> : vector<128x256xf32>
    %15 = tpu.matmul %13, %14, %cst_10 {dimension_numbers = #tpu.dot_dimension_numbers<[1], [0], [0], [1], [0, 0, 1, 1], [], []>} : vector<128x128xbf16>, vector<128x256xbf16>, vector<128x256xf32> -> vector<128x256xf32>
    %c0_11 = arith.constant 0 : index
    %c0_12 = arith.constant 0 : index
    %16 = vector.load %arg6[%c0_11, %c0_12] : memref<128x1xf32, #tpu.memory_space<vmem>>, vector<128x1xf32>
    %17 = vector.broadcast %16 : vector<128x1xf32> to vector<128x256xf32>
    %18 = arith.addf %15, %17 : vector<128x256xf32>
    %cst_13 = arith.constant 0.000000e+00 : f32
    %19 = vector.broadcast %cst_13 : f32 to vector<128x256xf32>
    %20 = arith.maximumf %18, %19 : vector<128x256xf32>
    %c0_14 = arith.constant 0 : index
    %c0_15 = arith.constant 0 : index
    %21 = vector.load %arg7[%c0_14, %c0_15] : memref<128x1xf32, #tpu.memory_space<vmem>>, vector<128x1xf32>
    %22 = vector.broadcast %21 : vector<128x1xf32> to vector<128x256xf32>
    %23 = arith.mulf %20, %22 : vector<128x256xf32>
    %cst_16 = arith.constant dense<0.000000e+00> : vector<256xf32>
    %24 = vector.multi_reduction <add>, %23, %cst_16 [0] : vector<128x256xf32> to vector<256xf32>
    %25 = vector.shape_cast %24 : vector<256xf32> to vector<1x256xf32>
    %c0_17 = arith.constant 0 : index
    %c0_18 = arith.constant 0 : index
    %26 = memref.load %arg8[%c0_17, %c0_18] : memref<1x1xf32, #tpu.memory_space<smem>>
    %27 = vector.broadcast %26 : f32 to vector<1x256xf32>
    %28 = arith.addf %25, %27 : vector<1x256xf32>
    %c0_19 = arith.constant 0 : index
    %c0_20 = arith.constant 0 : index
    %29 = vector.load %arg9[%c0_19, %c0_20] : memref<1x256xf32, #tpu.memory_space<vmem>>, vector<1x256xf32>
    tpu.vector_store %arg9[%c0_19, %c0_20], %28 {strides = array<i32>} : memref<1x256xf32, #tpu.memory_space<vmem>>, vector<1x256xf32>,
    return
  }
  func.func @transform_0(%arg0: i32) -> (i32, i32) {
    %c0_i32 = arith.constant 0 : i32
    %c0_i32_0 = arith.constant 0 : i32
    return %c0_i32, %arg0 : i32, i32
  }
  func.func @transform_1(%arg0: i32) -> (i32, i32) {
    %c0_i32 = arith.constant 0 : i32
    %c0_i32_0 = arith.constant 0 : i32
    return %c0_i32, %arg0 : i32, i32
  }
  func.func @transform_2(%arg0: i32) -> (i32, i32) {
    %c0_i32 = arith.constant 0 : i32
    %c0_i32_0 = arith.constant 0 : i32
    %c0_i32_1 = arith.constant 0 : i32
    return %c0_i32, %c0_i32_0 : i32, i32
  }
  func.func @transform_3(%arg0: i32) -> (i32, i32) {
    %c0_i32 = arith.constant 0 : i32
    %c0_i32_0 = arith.constant 0 : i32
    %c0_i32_1 = arith.constant 0 : i32
    return %c0_i32, %c0_i32_0 : i32, i32
  }
  func.func @transform_4(%arg0: i32) -> (i32, i32) {
    %c0_i32 = arith.constant 0 : i32
    %c0_i32_0 = arith.constant 0 : i32
    %c0_i32_1 = arith.constant 0 : i32
    return %c0_i32, %c0_i32_0 : i32, i32
  }
  func.func @transform_5(%arg0: i32) -> (i32, i32) {
    %c0_i32 = arith.constant 0 : i32
    %c0_i32_0 = arith.constant 0 : i32
    %c0_i32_1 = arith.constant 0 : i32
    return %c0_i32, %c0_i32_0 : i32, i32
  }
  func.func @transform_6(%arg0: i32) -> (i32, i32) {
    %c0_i32 = arith.constant 0 : i32
    %c0_i32_0 = arith.constant 0 : i32
    %c0_i32_1 = arith.constant 0 : i32
    return %c0_i32, %c0_i32_0 : i32, i32
  }
  func.func @transform_7(%arg0: i32) -> (i32, i32) {
    %c0_i32 = arith.constant 0 : i32
    %c0_i32_0 = arith.constant 0 : i32
    %c0_i32_1 = arith.constant 0 : i32
    return %c0_i32, %c0_i32_0 : i32, i32
  }
  func.func @transform_8(%arg0: i32) -> (i32, i32) {
    %c0_i32 = arith.constant 0 : i32
    %c0_i32_0 = arith.constant 0 : i32
    return %c0_i32, %arg0 : i32, i32
  }
}

</mosaic_0001>

<llo_original>
// kernel: tpu_custom_call.1
$region0: #{tpu_custom_call.1}
  #allocation0 [shape = 'u32[]', space=smem, size = 0x4, offset = 0x4, fixed_abs, tag = 'smem constant byte address 0x4 - core index']
  #allocation1 [shape = 'u32[72,128]{1,0:T(1,128)}', space=vmem, size = 0x9000, scoped, tag = 'internal scratch']
  #allocation2 [shape = 'f32[1,1]{1,0:T(1,128)S(6)}', space=smem, size = 0x200, scoped, tag = 'scoped memory for tpu_custom_call.1']
  %s0 = inlined_call_operand.vmem [shape: bf16[32,512], index: 0, kind: input, shape index: {}]
  %s1 = inlined_call_operand.vmem [shape: bf16[32,512], index: 1, kind: input, shape index: {}]
  %s2 = inlined_call_operand.vmem [shape: bf16[128,32], index: 2, kind: input, shape index: {}]
  %s3 = inlined_call_operand.vmem [shape: f32[128,1], index: 3, kind: input, shape index: {}]
  %s4 = inlined_call_operand.vmem [shape: bf16[128,128], index: 4, kind: input, shape index: {}]
  %s5 = inlined_call_operand.vmem [shape: f32[128,1], index: 5, kind: input, shape index: {}]
  %s6 = inlined_call_operand.vmem [shape: f32[128,1], index: 6, kind: input, shape index: {}]
  %s7 = inlined_call_operand.<no memory space> [shape: f32[1,1], index: 7, kind: input, shape index: {}]
  %s8 = inlined_call_operand.hbm [shape: f32[1,512], index: 8, kind: output, shape index: {}]
  %s9 = sld [smem:[#allocation0]]
  $region141: #{tpu_custom_call.1} parent=0
    _
  %s11 = ssub.s32 1, %s9
  %s12 = scalar_select 0, %s11, %s9
  %13 = sst [smem:[#allocation2]] %s7
  $region1: #{tpu_custom_call.1} parent=0
    #allocation3 [shape = 'u8[32768]{0}', space=vmem, size = 0x8000, scoped, tag = 'input window, operand 0']
    #allocation4 [shape = 'u8[32768]{0}', space=vmem, size = 0x8000, scoped, tag = 'input window, operand 1']
    #allocation5 [shape = 'u8[2048]{0}', space=vmem, size = 0x800, scoped, tag = 'output window, operand 0']
    #allocation6 [shape = 's32[2]{0}', space=sflag, size = 0x8, scoped, tag = 'scoped memory for tpu_custom_call.1']
    %14 = vsyncpa [#allocation6], 0
    %s15 = scalar_lea.sflag [#allocation6], 1
    %16 = vsyncpa %s15, 0
    loop: start=0, step=1, limit=4
    $region2: #{tpu_custom_call.1} parent=1 // loop_pre_header
      _
    $region3: #{tpu_custom_call.1} parent=1 // loop_header
      %s18 = sphi 0, %s22
      %p19 = scmp.ge.s32.totalorder %s18, 4
      %s28 = sphi 0, %s30
      %s31 = sphi 0, %s28
      %s32 = sphi 0, %s31
      %s48 = sphi 0, %s32
      %s54 = sphi 0, %s56
      %s57 = sphi 0, %s54
      %s58 = sphi 0, %s57
      %s74 = sphi 0, %s58
      %s78 = sphi 0, %s78
      %s80 = sphi 0, %s78
      %s81 = sphi 0, %s80
      %s95 = sphi 0, %s81
      %s99 = sphi 0, %s99
      %s101 = sphi 0, %s99
      %s102 = sphi 0, %s101
      %s116 = sphi 0, %s102
      %s120 = sphi 0, %s120
      %s122 = sphi 0, %s120
      %s123 = sphi 0, %s122
      %s137 = sphi 0, %s123
      %s141 = sphi 0, %s141
      %s143 = sphi 0, %s141
      %s144 = sphi 0, %s143
      %s158 = sphi 0, %s144
      %s162 = sphi 0, %s162
      %s164 = sphi 0, %s162
      %s165 = sphi 0, %s164
      %s179 = sphi 0, %s165
      %s183 = sphi 0, %s183
      %s185 = sphi 0, %s183
      %s186 = sphi 0, %s185
      %s200 = sphi 0, %s186
      %s206 = sphi 0, %s208
      %s209 = sphi 0, %s206
      %s210 = sphi 0, %s209
      %s226 = sphi 0, %s210
    $region4: #{tpu_custom_call.1} parent=1 // loop_header_branch
      %21 = sbr.rel (%p19) target = $region8
    $region5: #{tpu_custom_call.1} parent=1 // loop_body
      %s23 = ssub.s32 %s18, 1
      %s24 = ssub.s32 %s18, 2
      %s25 = sadd.s32 %s18, 1
      %s26 = ssub.s32 %s18, %s25
      %p27 = scmp.eq.s32.totalorder %s26, 0
      %s29 = sadd.s32 %s28, 1
      %s30 = scalar_select %p27, %s28, %s29
      %p33 = pneg %p27
      %p34 = scmp.eq.s32.totalorder %s18, 1
      %p35 = por %p33, %p34
      %p36 = scmp.ne.s32.totalorder %s28, %s31
      %p37 = scmp.eq.s32.totalorder %s18, 0
      %p38 = por %p36, %p37
      %p39 = scmp.ne.s32.totalorder %s28, %s31
      %p40 = scmp.eq.s32.totalorder %s23, 1
      %p41 = por %p39, %p40
      %p42 = scmp.ne.s32.totalorder %s31, %s32
      %p43 = scmp.eq.s32.totalorder %s23, 0
      %p44 = por %p42, %p43
      %p45 = scmp.ne.s32.totalorder %s31, %s32
      %p46 = scmp.eq.s32.totalorder %s24, 1
      %p47 = por %p45, %p46
      %p49 = scmp.ne.s32.totalorder %s32, %s48
      %p50 = scmp.eq.s32.totalorder %s24, 0
      %p51 = por %p49, %p50
      %s52 = ssub.s32 %s18, %s25
      %p53 = scmp.eq.s32.totalorder %s52, 0
      %s55 = sadd.s32 %s54, 1
      %s56 = scalar_select %p53, %s54, %s55
      %p59 = pneg %p53
      %p60 = scmp.eq.s32.totalorder %s18, 1
      %p61 = por %p59, %p60
      %p62 = scmp.ne.s32.totalorder %s54, %s57
      %p63 = scmp.eq.s32.totalorder %s18, 0
      %p64 = por %p62, %p63
      %p65 = scmp.ne.s32.totalorder %s54, %s57
      %p66 = scmp.eq.s32.totalorder %s23, 1
      %p67 = por %p65, %p66
      %p68 = scmp.ne.s32.totalorder %s57, %s58
      %p69 = scmp.eq.s32.totalorder %s23, 0
      %p70 = por %p68, %p69
      %p71 = scmp.ne.s32.totalorder %s57, %s58
      %p72 = scmp.eq.s32.totalorder %s24, 1
      %p73 = por %p71, %p72
      %p75 = scmp.ne.s32.totalorder %s58, %s74
      %p76 = scmp.eq.s32.totalorder %s24, 0
      %p77 = por %p75, %p76
      %s79 = sadd.s32 %s78, 1
      %p82 = scmp.eq.s32.totalorder %s18, 1
      %p83 = scmp.ne.s32.totalorder %s78, %s80
      %p84 = scmp.eq.s32.totalorder %s18, 0
      %p85 = por %p83, %p84
      %p86 = scmp.ne.s32.totalorder %s78, %s80
      %p87 = scmp.eq.s32.totalorder %s23, 1
      %p88 = por %p86, %p87
      %p89 = scmp.ne.s32.totalorder %s80, %s81
      %p90 = scmp.eq.s32.totalorder %s23, 0
      %p91 = por %p89, %p90
      %p92 = scmp.ne.s32.totalorder %s80, %s81
      %p93 = scmp.eq.s32.totalorder %s24, 1
      %p94 = por %p92, %p93
      %p96 = scmp.ne.s32.totalorder %s81, %s95
      %p97 = scmp.eq.s32.totalorder %s24, 0
      %p98 = por %p96, %p97
      %s100 = sadd.s32 %s99, 1
      %p103 = scmp.eq.s32.totalorder %s18, 1
      %p104 = scmp.ne.s32.totalorder %s99, %s101
      %p105 = scmp.eq.s32.totalorder %s18, 0
      %p106 = por %p104, %p105
      %p107 = scmp.ne.s32.totalorder %s99, %s101
      %p108 = scmp.eq.s32.totalorder %s23, 1
      %p109 = por %p107, %p108
      %p110 = scmp.ne.s32.totalorder %s101, %s102
      %p111 = scmp.eq.s32.totalorder %s23, 0
      %p112 = por %p110, %p111
      %p113 = scmp.ne.s32.totalorder %s101, %s102
      %p114 = scmp.eq.s32.totalorder %s24, 1
      %p115 = por %p113, %p114
      %p117 = scmp.ne.s32.totalorder %s102, %s116
      %p118 = scmp.eq.s32.totalorder %s24, 0
      %p119 = por %p117, %p118
      %s121 = sadd.s32 %s120, 1
      %p124 = scmp.eq.s32.totalorder %s18, 1
      %p125 = scmp.ne.s32.totalorder %s120, %s122
      %p126 = scmp.eq.s32.totalorder %s18, 0
      %p127 = por %p125, %p126
      %p128 = scmp.ne.s32.totalorder %s120, %s122
      %p129 = scmp.eq.s32.totalorder %s23, 1
      %p130 = por %p128, %p129
      %p131 = scmp.ne.s32.totalorder %s122, %s123
      %p132 = scmp.eq.s32.totalorder %s23, 0
      %p133 = por %p131, %p132
      %p134 = scmp.ne.s32.totalorder %s122, %s123
      %p135 = scmp.eq.s32.totalorder %s24, 1
      %p136 = por %p134, %p135
      %p138 = scmp.ne.s32.totalorder %s123, %s137
      %p139 = scmp.eq.s32.totalorder %s24, 0
      %p140 = por %p138, %p139
      %s142 = sadd.s32 %s141, 1
      %p145 = scmp.eq.s32.totalorder %s18, 1
      %p146 = scmp.ne.s32.totalorder %s141, %s143
      %p147 = scmp.eq.s32.totalorder %s18, 0
      %p148 = por %p146, %p147
      %p149 = scmp.ne.s32.totalorder %s141, %s143
      %p150 = scmp.eq.s32.totalorder %s23, 1
      %p151 = por %p149, %p150
      %p152 = scmp.ne.s32.totalorder %s143, %s144
      %p153 = scmp.eq.s32.totalorder %s23, 0
      %p154 = por %p152, %p153
      %p155 = scmp.ne.s32.totalorder %s143, %s144
      %p156 = scmp.eq.s32.totalorder %s24, 1
      %p157 = por %p155, %p156
      %p159 = scmp.ne.s32.totalorder %s144, %s158
      %p160 = scmp.eq.s32.totalorder %s24, 0
      %p161 = por %p159, %p160
      %s163 = sadd.s32 %s162, 1
      %p166 = scmp.eq.s32.totalorder %s18, 1
      %p167 = scmp.ne.s32.totalorder %s162, %s164
      %p168 = scmp.eq.s32.totalorder %s18, 0
      %p169 = por %p167, %p168
      %p170 = scmp.ne.s32.totalorder %s162, %s164
      %p171 = scmp.eq.s32.totalorder %s23, 1
      %p172 = por %p170, %p171
      %p173 = scmp.ne.s32.totalorder %s164, %s165
      %p174 = scmp.eq.s32.totalorder %s23, 0
      %p175 = por %p173, %p174
      %p176 = scmp.ne.s32.totalorder %s164, %s165
      %p177 = scmp.eq.s32.totalorder %s24, 1
      %p178 = por %p176, %p177
      %p180 = scmp.ne.s32.totalorder %s165, %s179
      %p181 = scmp.eq.s32.totalorder %s24, 0
      %p182 = por %p180, %p181
      %s184 = sadd.s32 %s183, 1
      %p187 = scmp.eq.s32.totalorder %s18, 1
      %p188 = scmp.ne.s32.totalorder %s183, %s185
      %p189 = scmp.eq.s32.totalorder %s18, 0
      %p190 = por %p188, %p189
      %p191 = scmp.ne.s32.totalorder %s183, %s185
      %p192 = scmp.eq.s32.totalorder %s23, 1
      %p193 = por %p191, %p192
      %p194 = scmp.ne.s32.totalorder %s185, %s186
      %p195 = scmp.eq.s32.totalorder %s23, 0
      %p196 = por %p194, %p195
      %p197 = scmp.ne.s32.totalorder %s185, %s186
      %p198 = scmp.eq.s32.totalorder %s24, 1
      %p199 = por %p197, %p198
      %p201 = scmp.ne.s32.totalorder %s186, %s200
      %p202 = scmp.eq.s32.totalorder %s24, 0
      %p203 = por %p201, %p202
      %s204 = ssub.s32 %s18, %s25
      %p205 = scmp.eq.s32.totalorder %s204, 0
      %s207 = sadd.s32 %s206, 1
      %s208 = scalar_select %p205, %s206, %s207
      %p211 = pneg %p205
      %p212 = scmp.eq.s32.totalorder %s18, 1
      %p213 = por %p211, %p212
      %p214 = scmp.ne.s32.totalorder %s206, %s209
      %p215 = scmp.eq.s32.totalorder %s18, 0
      %p216 = por %p214, %p215
      %p217 = scmp.ne.s32.totalorder %s206, %s209
      %p218 = scmp.eq.s32.totalorder %s23, 1
      %p219 = por %p217, %p218
      %p220 = scmp.ne.s32.totalorder %s209, %s210
      %p221 = scmp.eq.s32.totalorder %s23, 0
      %p222 = por %p220, %p221
      %p223 = scmp.ne.s32.totalorder %s209, %s210
      %p224 = scmp.eq.s32.totalorder %s24, 1
      %p225 = por %p223, %p224
      %p227 = scmp.ne.s32.totalorder %s210, %s226
      %p228 = scmp.eq.s32.totalorder %s24, 0
      %p229 = por %p227, %p228
      %p230 = scmp.le.s32.totalorder 1, %s18
      %p231 = scmp.lt.s32.totalorder %s18, 3
      %p232 = pnand %p230, %p231
      %p233 = pneg %p232
      // Predicated region
      $region9: #{tpu_custom_call.1} parent=5 // pred_check
        _
      $region10: #{tpu_custom_call.1} parent=5 // pred_check_branch
        %235 = sbr.rel (%p232) target = $region12
      $region11: #{tpu_custom_call.1} parent=5 // pred_region
        %s236 = ssub.s32 %s18, 1
        // Predicated region
        $region13: #{tpu_custom_call.1} parent=11 // pred_check
          %p237 = pneg %p91
        $region14: #{tpu_custom_call.1} parent=11 // pred_check_branch
          %239 = sbr.rel (%p237) target = $region16
        $region15: #{tpu_custom_call.1} parent=11 // pred_region
          _
        $region16: #{tpu_custom_call.1} parent=11 // pred_fallthru
          _
        // Predicated region
        $region17: #{tpu_custom_call.1} parent=11 // pred_check
          %p240 = pneg %p112
        $region18: #{tpu_custom_call.1} parent=11 // pred_check_branch
          %242 = sbr.rel (%p240) target = $region20
        $region19: #{tpu_custom_call.1} parent=11 // pred_region
          _
        $region20: #{tpu_custom_call.1} parent=11 // pred_fallthru
          _
        // Predicated region
        $region21: #{tpu_custom_call.1} parent=11 // pred_check
          %p243 = pneg %p133
        $region22: #{tpu_custom_call.1} parent=11 // pred_check_branch
          %245 = sbr.rel (%p243) target = $region24
        $region23: #{tpu_custom_call.1} parent=11 // pred_region
          _
        $region24: #{tpu_custom_call.1} parent=11 // pred_fallthru
          _
        // Predicated region
        $region25: #{tpu_custom_call.1} parent=11 // pred_check
          %p246 = pneg %p154
        $region26: #{tpu_custom_call.1} parent=11 // pred_check_branch
          %248 = sbr.rel (%p246) target = $region28
        $region27: #{tpu_custom_call.1} parent=11 // pred_region
          _
        $region28: #{tpu_custom_call.1} parent=11 // pred_fallthru
          _
        // Predicated region
        $region29: #{tpu_custom_call.1} parent=11 // pred_check
          %p249 = pneg %p175
        $region30: #{tpu_custom_call.1} parent=11 // pred_check_branch
          %251 = sbr.rel (%p249) target = $region32
        $region31: #{tpu_custom_call.1} parent=11 // pred_region
          _
        $region32: #{tpu_custom_call.1} parent=11 // pred_fallthru
          _
        // Predicated region
        $region33: #{tpu_custom_call.1} parent=11 // pred_check
          %p252 = pneg %p196
        $region34: #{tpu_custom_call.1} parent=11 // pred_check_branch
          %254 = sbr.rel (%p252) target = $region36
        $region35: #{tpu_custom_call.1} parent=11 // pred_region
          _
        $region36: #{tpu_custom_call.1} parent=11 // pred_fallthru
          _
      $region12: #{tpu_custom_call.1} parent=5 // pred_fallthru
        _
      %p255 = scmp.lt.s32.totalorder %s18, 2
      // Predicated region
      $region37: #{tpu_custom_call.1} parent=5 // pred_check
        %p256 = pneg %p255
      $region38: #{tpu_custom_call.1} parent=5 // pred_check_branch
        %258 = sbr.rel (%p256) target = $region40
      $region39: #{tpu_custom_call.1} parent=5 // pred_region
        // Predicated region
        $region41: #{tpu_custom_call.1} parent=39 // pred_check
          %p259 = pneg %p38
        $region42: #{tpu_custom_call.1} parent=39 // pred_check_branch
          %261 = sbr.rel (%p259) target = $region44
        $region43: #{tpu_custom_call.1} parent=39 // pred_region
          %s262 = sand.u32 %s28, 1
          %s263 = sand.u32 %s28, 1
          %s264 = smul.addr %s263, 32
          %s265 = scalar_lea.vmem [#allocation3], %s264
          %s266 = smul.u32 2, %s18
          %s267 = smul.addr %s266, 4
          %s268 = scalar_lea.vmem %s0, %s267
          // Predicated region
          $region45: #{tpu_custom_call.1} parent=43 // pred_check
            _
          $region46: #{tpu_custom_call.1} parent=43 // pred_check_branch
            %270 = sbr.rel (0) target = $region48
          $region47: #{tpu_custom_call.1} parent=43 // pred_region
            // Predicated region
            $region49: #{tpu_custom_call.1} parent=47 // pred_check
              _
            $region50: #{tpu_custom_call.1} parent=47 // pred_check_branch
              %272 = sbr.rel (0) target = $region52
            $region51: #{tpu_custom_call.1} parent=47 // pred_region
              // Predicated region
              $region64: #{tpu_custom_call.1} parent=51 // pred_check
                _
              $region65: #{tpu_custom_call.1} parent=51 // pred_check_branch
                %294 = sbr.rel (0) target = $region67
              $region66: #{tpu_custom_call.1} parent=51 // pred_region
                loop: start=0, step=1, limit=1
                $region68: #{tpu_custom_call.1} parent=66 // loop_pre_header
                  _
                $region69: #{tpu_custom_call.1} parent=66 // loop_header
                  %s296 = sphi 0, %s300
                  %p297 = scmp.ge.s32.totalorder %s296, 1
                  %s301 = sphi %s268, %s268
                  %s302 = sphi %s265, %s265
                $region70: #{tpu_custom_call.1} parent=66 // loop_header_branch
                  %299 = sbr.rel (%p297) target = $region74
                $region71: #{tpu_custom_call.1} parent=66 // loop_body
                  %v303 = vld [vmem:[%s301] sm:$0xff]
                  %304 = vst [vmem:[%s302] sm:$0xff] %v303
                  %v305 = vld [vmem:[%s301 + $0x10] sm:$0xff]
                  %306 = vst [vmem:[%s302 + $0x8] sm:$0xff] %v305
                  %v307 = vld [vmem:[%s301 + $0x20] sm:$0xff]
                  %308 = vst [vmem:[%s302 + $0x10] sm:$0xff] %v307
                  %v309 = vld [vmem:[%s301 + $0x30] sm:$0xff]
                  %310 = vst [vmem:[%s302 + $0x18] sm:$0xff] %v309
                $region72: #{tpu_custom_call.1} parent=66 // loop_footer
                  %s300 = sadd.s32 1, %s296
                $region73: #{tpu_custom_call.1} parent=66 // loop_footer_branch
                  %295 = sbr.rel target = $region69
                $region74: #{tpu_custom_call.1} parent=66 // loop_exit
                  _
              $region67: #{tpu_custom_call.1} parent=51 // pred_fallthru
                _
              // Predicated region
              $region75: #{tpu_custom_call.1} parent=51 // pred_check
                _
              $region76: #{tpu_custom_call.1} parent=51 // pred_check_branch
                %312 = sbr.rel target = $region78
              $region77: #{tpu_custom_call.1} parent=51 // pred_region
                _
              $region78: #{tpu_custom_call.1} parent=51 // pred_fallthru
                _
            $region52: #{tpu_custom_call.1} parent=47 // pred_fallthru
              _
            // Predicated region
            $region53: #{tpu_custom_call.1} parent=47 // pred_check
              _
            $region54: #{tpu_custom_call.1} parent=47 // pred_check_branch
              %274 = sbr.rel target = $region56
            $region55: #{tpu_custom_call.1} parent=47 // pred_region
              %s276 = ssub.s32 256, 1
              loop: start=0, step=1, limit=1
              $region57: #{tpu_custom_call.1} parent=55 // loop_pre_header
                _
              $region58: #{tpu_custom_call.1} parent=55 // loop_header
                %s278 = sphi 0, %s282
                %p279 = scmp.ge.s32.totalorder %s278, 1
                %s283 = sphi %s268, %s268
                %s284 = sphi %s265, %s265
              $region59: #{tpu_custom_call.1} parent=55 // loop_header_branch
                %281 = sbr.rel (%p279) target = $region63
              $region60: #{tpu_custom_call.1} parent=55 // loop_body
                %v285 = vld [vmem:[%s283] sm:%s276]
                %286 = vst [vmem:[%s284] sm:%s276] %v285
                %v287 = vld [vmem:[%s283 + $0x10] sm:%s276]
                %288 = vst [vmem:[%s284 + $0x8] sm:%s276] %v287
                %v289 = vld [vmem:[%s283 + $0x20] sm:%s276]
                %290 = vst [vmem:[%s284 + $0x10] sm:%s276] %v289
                %v291 = vld [vmem:[%s283 + $0x30] sm:%s276]
                %292 = vst [vmem:[%s284 + $0x18] sm:%s276] %v291
              $region61: #{tpu_custom_call.1} parent=55 // loop_footer
                %s282 = sadd.s32 1, %s278
              $region62: #{tpu_custom_call.1} parent=55 // loop_footer_branch
                %277 = sbr.rel target = $region58
              $region63: #{tpu_custom_call.1} parent=55 // loop_exit
                _
            $region56: #{tpu_custom_call.1} parent=47 // pred_fallthru
              _
          $region48: #{tpu_custom_call.1} parent=43 // pred_fallthru
            _
          %313 = vnop
        $region44: #{tpu_custom_call.1} parent=39 // pred_fallthru
          _
        // Predicated region
        $region79: #{tpu_custom_call.1} parent=39 // pred_check
          %p314 = pneg %p64
        $region80: #{tpu_custom_call.1} parent=39 // pred_check_branch
          %316 = sbr.rel (%p314) target = $region82
        $region81: #{tpu_custom_call.1} parent=39 // pred_region
          %s317 = sand.u32 %s54, 1
          %s318 = sand.u32 %s54, 1
          %s319 = smul.addr %s318, 32
          %s320 = scalar_lea.vmem [#allocation4], %s319
          %s321 = smul.u32 2, %s18
          %s322 = smul.addr %s321, 4
          %s323 = scalar_lea.vmem %s1, %s322
          // Predicated region
          $region83: #{tpu_custom_call.1} parent=81 // pred_check
            _
          $region84: #{tpu_custom_call.1} parent=81 // pred_check_branch
            %325 = sbr.rel (0) target = $region86
          $region85: #{tpu_custom_call.1} parent=81 // pred_region
            // Predicated region
            $region87: #{tpu_custom_call.1} parent=85 // pred_check
              _
            $region88: #{tpu_custom_call.1} parent=85 // pred_check_branch
              %327 = sbr.rel (0) target = $region90
            $region89: #{tpu_custom_call.1} parent=85 // pred_region
              // Predicated region
              $region102: #{tpu_custom_call.1} parent=89 // pred_check
                _
              $region103: #{tpu_custom_call.1} parent=89 // pred_check_branch
                %349 = sbr.rel (0) target = $region105
              $region104: #{tpu_custom_call.1} parent=89 // pred_region
                loop: start=0, step=1, limit=1
                $region106: #{tpu_custom_call.1} parent=104 // loop_pre_header
                  _
                $region107: #{tpu_custom_call.1} parent=104 // loop_header
                  %s351 = sphi 0, %s355
                  %p352 = scmp.ge.s32.totalorder %s351, 1
                  %s356 = sphi %s323, %s323
                  %s357 = sphi %s320, %s320
                $region108: #{tpu_custom_call.1} parent=104 // loop_header_branch
                  %354 = sbr.rel (%p352) target = $region112
                $region109: #{tpu_custom_call.1} parent=104 // loop_body
                  %v358 = vld [vmem:[%s356] sm:$0xff]
                  %359 = vst [vmem:[%s357] sm:$0xff] %v358
                  %v360 = vld [vmem:[%s356 + $0x10] sm:$0xff]
                  %361 = vst [vmem:[%s357 + $0x8] sm:$0xff] %v360
                  %v362 = vld [vmem:[%s356 + $0x20] sm:$0xff]
                  %363 = vst [vmem:[%s357 + $0x10] sm:$0xff] %v362
                  %v364 = vld [vmem:[%s356 + $0x30] sm:$0xff]
                  %365 = vst [vmem:[%s357 + $0x18] sm:$0xff] %v364
                $region110: #{tpu_custom_call.1} parent=104 // loop_footer
                  %s355 = sadd.s32 1, %s351
                $region111: #{tpu_custom_call.1} parent=104 // loop_footer_branch
                  %350 = sbr.rel target = $region107
                $region112: #{tpu_custom_call.1} parent=104 // loop_exit
                  _
              $region105: #{tpu_custom_call.1} parent=89 // pred_fallthru
                _
              // Predicated region
              $region113: #{tpu_custom_call.1} parent=89 // pred_check
                _
              $region114: #{tpu_custom_call.1} parent=89 // pred_check_branch
                %367 = sbr.rel target = $region116
              $region115: #{tpu_custom_call.1} parent=89 // pred_region
                _
              $region116: #{tpu_custom_call.1} parent=89 // pred_fallthru
                _
            $region90: #{tpu_custom_call.1} parent=85 // pred_fallthru
              _
            // Predicated region
            $region91: #{tpu_custom_call.1} parent=85 // pred_check
              _
            $region92: #{tpu_custom_call.1} parent=85 // pred_check_branch
              %329 = sbr.rel target = $region94
            $region93: #{tpu_custom_call.1} parent=85 // pred_region
              %s331 = ssub.s32 256, 1
              loop: start=0, step=1, limit=1
              $region95: #{tpu_custom_call.1} parent=93 // loop_pre_header
                _
              $region96: #{tpu_custom_call.1} parent=93 // loop_header
                %s333 = sphi 0, %s337
                %p334 = scmp.ge.s32.totalorder %s333, 1
                %s338 = sphi %s323, %s323
                %s339 = sphi %s320, %s320
              $region97: #{tpu_custom_call.1} parent=93 // loop_header_branch
                %336 = sbr.rel (%p334) target = $region101
              $region98: #{tpu_custom_call.1} parent=93 // loop_body
                %v340 = vld [vmem:[%s338] sm:%s331]
                %341 = vst [vmem:[%s339] sm:%s331] %v340
                %v342 = vld [vmem:[%s338 + $0x10] sm:%s331]
                %343 = vst [vmem:[%s339 + $0x8] sm:%s331] %v342
                %v344 = vld [vmem:[%s338 + $0x20] sm:%s331]
                %345 = vst [vmem:[%s339 + $0x10] sm:%s331] %v344
                %v346 = vld [vmem:[%s338 + $0x30] sm:%s331]
                %347 = vst [vmem:[%s339 + $0x18] sm:%s331] %v346
              $region99: #{tpu_custom_call.1} parent=93 // loop_footer
                %s337 = sadd.s32 1, %s333
              $region100: #{tpu_custom_call.1} parent=93 // loop_footer_branch
                %332 = sbr.rel target = $region96
              $region101: #{tpu_custom_call.1} parent=93 // loop_exit
                _
            $region94: #{tpu_custom_call.1} parent=85 // pred_fallthru
              _
          $region86: #{tpu_custom_call.1} parent=81 // pred_fallthru
            _
          %368 = vnop
        $region82: #{tpu_custom_call.1} parent=39 // pred_fallthru
          _
      $region40: #{tpu_custom_call.1} parent=5 // pred_fallthru
        _
      %p369 = scmp.le.s32.totalorder 1, %s18
      %p370 = scmp.lt.s32.totalorder %s18, 3
      %p371 = pnand %p369, %p370
      %p372 = pneg %p371
      // Predicated region
      $region117: #{tpu_custom_call.1} parent=5 // pred_check
        _
      $region118: #{tpu_custom_call.1} parent=5 // pred_check_branch
        %374 = sbr.rel (%p371) target = $region120
      $region119: #{tpu_custom_call.1} parent=5 // pred_region
        %s375 = ssub.s32 %s18, 1
        %s376 = sand.u32 %s31, 1
        %s377 = sand.u32 %s31, 1
        %s378 = smul.addr %s377, 32
        %s379 = scalar_lea.vmem [#allocation3], %s378
        // Predicated region
        $region121: #{tpu_custom_call.1} parent=119 // pred_check
          %p380 = pneg %p44
        $region122: #{tpu_custom_call.1} parent=119 // pred_check_branch
          %382 = sbr.rel (%p380) target = $region124
        $region123: #{tpu_custom_call.1} parent=119 // pred_region
          _
        $region124: #{tpu_custom_call.1} parent=119 // pred_fallthru
          _
        %s383 = sand.u32 %s57, 1
        %s384 = sand.u32 %s57, 1
        %s385 = smul.addr %s384, 32
        %s386 = scalar_lea.vmem [#allocation4], %s385
        // Predicated region
        $region125: #{tpu_custom_call.1} parent=119 // pred_check
          %p387 = pneg %p70
        $region126: #{tpu_custom_call.1} parent=119 // pred_check_branch
          %389 = sbr.rel (%p387) target = $region128
        $region127: #{tpu_custom_call.1} parent=119 // pred_region
          _
        $region128: #{tpu_custom_call.1} parent=119 // pred_fallthru
          _
        %s390 = sand.u32 %s31, 1
        %s391 = sand.u32 %s31, 1
        %s392 = smul.addr %s391, 32
        %s393 = scalar_lea.vmem [#allocation3], %s392
        %p394 = pneg %p44
        %p395 = pneg %p41
        %s396 = sand.u32 %s57, 1
        %s397 = sand.u32 %s57, 1
        %s398 = smul.addr %s397, 32
        %s399 = scalar_lea.vmem [#allocation4], %s398
        %p400 = pneg %p70
        %p401 = pneg %p67
        %p402 = pneg %p91
        %p403 = pneg %p88
        %p404 = pneg %p112
        %p405 = pneg %p109
        %p406 = pneg %p133
        %p407 = pneg %p130
        %p408 = pneg %p154
        %p409 = pneg %p151
        %p410 = pneg %p175
        %p411 = pneg %p172
        %p412 = pneg %p196
        %p413 = pneg %p193
        %p414 = pneg %p222
        %p415 = pneg %p219
        %s416 = sand.u32 %s209, 1
        %s417 = scalar_lea.sflag [#allocation6], %s416
        %s418 = sand.u32 %s209, 1
        %s419 = smul.addr %s418, 2
        %s420 = scalar_lea.vmem [#allocation5], %s419
        %s421 = smul.u32 2, %s23
        %s422 = smul.u32 2, %s23
        %s423 = smul.u32 2, %s23
        %v425 = vld [vmem:[%s379] sm:$0xff]
        %v426 = vld [vmem:[%s379 + $0x8] sm:$0xff]
        %v427 = vld [vmem:[%s379 + $0x10] sm:$0xff]
        %v428 = vld [vmem:[%s379 + $0x18] sm:$0xff]
        %v429 = vunpack.c.l.bf16 %v425
        %v430 = vunpack.c.h.bf16 %v425
        %v431 = vunpack.c.l.bf16 %v426
        %v432 = vunpack.c.h.bf16 %v426
        %v433 = vunpack.c.l.bf16 %v427
        %v434 = vunpack.c.h.bf16 %v427
        %v435 = vunpack.c.l.bf16 %v428
        %v436 = vunpack.c.h.bf16 %v428
        %v437 = vld [vmem:[%s386] sm:$0xff]
        %v438 = vld [vmem:[%s386 + $0x8] sm:$0xff]
        %v439 = vld [vmem:[%s386 + $0x10] sm:$0xff]
        %v440 = vld [vmem:[%s386 + $0x18] sm:$0xff]
        %v441 = vunpack.c.l.bf16 %v437
        %v442 = vunpack.c.h.bf16 %v437
        %v443 = vunpack.c.l.bf16 %v438
        %v444 = vunpack.c.h.bf16 %v438
        %v445 = vunpack.c.l.bf16 %v439
        %v446 = vunpack.c.h.bf16 %v439
        %v447 = vunpack.c.l.bf16 %v440
        %v448 = vunpack.c.h.bf16 %v440
        %v449 = vmul.f32 %v429, %v441
        %v450 = vmul.f32 %v430, %v442
        %v451 = vmul.f32 %v431, %v443
        %v452 = vmul.f32 %v432, %v444
        %v453 = vmul.f32 %v433, %v445
        %v454 = vmul.f32 %v434, %v446
        %v455 = vmul.f32 %v435, %v447
        %v456 = vmul.f32 %v436, %v448
        %v457 = vld [vmem:[%s2] sm:$0xf]
        %v458 = vld [vmem:[%s2 + $0x4] sm:$0xf]
        %v459 = vld [vmem:[%s2 + $0x8] sm:$0xf]
        %v460 = vld [vmem:[%s2 + $0xc] sm:$0xf]
        %v461 = vld [vmem:[%s2 + $0x10] sm:$0xf]
        %v462 = vld [vmem:[%s2 + $0x14] sm:$0xf]
        %v463 = vld [vmem:[%s2 + $0x18] sm:$0xf]
        %v464 = vld [vmem:[%s2 + $0x1c] sm:$0xf]
        %v465 = vld [vmem:[%s2 + $0x20] sm:$0xf]
        %v466 = vld [vmem:[%s2 + $0x24] sm:$0xf]
        %v467 = vld [vmem:[%s2 + $0x28] sm:$0xf]
        %v468 = vld [vmem:[%s2 + $0x2c] sm:$0xf]
        %v469 = vld [vmem:[%s2 + $0x30] sm:$0xf]
        %v470 = vld [vmem:[%s2 + $0x34] sm:$0xf]
        %v471 = vld [vmem:[%s2 + $0x38] sm:$0xf]
        %v472 = vld [vmem:[%s2 + $0x3c] sm:$0xf]
        %v473 = vpack.c.bf16 %v451, %v449
        %v474 = vpack.c.bf16 %v452, %v450
        %v475 = vpack.c.bf16 %v455, %v453
        %v476 = vpack.c.bf16 %v456, %v454
        %v477 = vld [vmem:[%s3] sm:$0xff]
        %v478 = vld [vmem:[%s3 + $0x8] sm:$0xff]
        %v479 = vld [vmem:[%s3 + $0x10] sm:$0xff]
        %v480 = vld [vmem:[%s3 + $0x18] sm:$0xff]
        %v481 = vld [vmem:[%s3 + $0x20] sm:$0xff]
        %v482 = vld [vmem:[%s3 + $0x28] sm:$0xff]
        %v483 = vld [vmem:[%s3 + $0x30] sm:$0xff]
        %v484 = vld [vmem:[%s3 + $0x38] sm:$0xff]
        %v485 = vld [vmem:[%s3 + $0x40] sm:$0xff]
        %v486 = vld [vmem:[%s3 + $0x48] sm:$0xff]
        %v487 = vld [vmem:[%s3 + $0x50] sm:$0xff]
        %v488 = vld [vmem:[%s3 + $0x58] sm:$0xff]
        %v489 = vld [vmem:[%s3 + $0x60] sm:$0xff]
        %v490 = vld [vmem:[%s3 + $0x68] sm:$0xff]
        %v491 = vld [vmem:[%s3 + $0x70] sm:$0xff]
        %v492 = vld [vmem:[%s3 + $0x78] sm:$0xff]
        %494 = vset.pattern.permute.xlu0 0
        %495 = vperm.xlu0 %494, %v477
        %v496 = vpop.permute.xlu0 %495
        %499 = vset.pattern.permute.xlu0 0
        %500 = vperm.xlu0 %499, %v478
        %v501 = vpop.permute.xlu0 %500
        %504 = vset.pattern.permute.xlu0 0
        %505 = vperm.xlu0 %504, %v479
        %v506 = vpop.permute.xlu0 %505
        %509 = vset.pattern.permute.xlu0 0
        %510 = vperm.xlu0 %509, %v480
        %v511 = vpop.permute.xlu0 %510
        %514 = vset.pattern.permute.xlu0 0
        %515 = vperm.xlu0 %514, %v481
        %v516 = vpop.permute.xlu0 %515
        %519 = vset.pattern.permute.xlu0 0
        %520 = vperm.xlu0 %519, %v482
        %v521 = vpop.permute.xlu0 %520
        %524 = vset.pattern.permute.xlu0 0
        %525 = vperm.xlu0 %524, %v483
        %v526 = vpop.permute.xlu0 %525
        %529 = vset.pattern.permute.xlu0 0
        %530 = vperm.xlu0 %529, %v484
        %v531 = vpop.permute.xlu0 %530
        %534 = vset.pattern.permute.xlu0 0
        %535 = vperm.xlu0 %534, %v485
        %v536 = vpop.permute.xlu0 %535
        %539 = vset.pattern.permute.xlu0 0
        %540 = vperm.xlu0 %539, %v486
        %v541 = vpop.permute.xlu0 %540
        %544 = vset.pattern.permute.xlu0 0
        %545 = vperm.xlu0 %544, %v487
        %v546 = vpop.permute.xlu0 %545
        %549 = vset.pattern.permute.xlu0 0
        %550 = vperm.xlu0 %549, %v488
        %v551 = vpop.permute.xlu0 %550
        %554 = vset.pattern.permute.xlu0 0
        %555 = vperm.xlu0 %554, %v489
        %v556 = vpop.permute.xlu0 %555
        %559 = vset.pattern.permute.xlu0 0
        %560 = vperm.xlu0 %559, %v490
        %v561 = vpop.permute.xlu0 %560
        %564 = vset.pattern.permute.xlu0 0
        %565 = vperm.xlu0 %564, %v491
        %v566 = vpop.permute.xlu0 %565
        %569 = vset.pattern.permute.xlu0 0
        %570 = vperm.xlu0 %569, %v492
        %v571 = vpop.permute.xlu0 %570
        %v589 = vunpack.c.l.b16 %v457
        %v590 = vunpack.c.l.b16 %v458
        %v591 = vunpack.c.l.b16 %v459
        %v592 = vunpack.c.l.b16 %v460
        %v593 = vunpack.c.l.b16 %v461
        %v594 = vunpack.c.l.b16 %v462
        %v595 = vunpack.c.l.b16 %v463
        %v596 = vunpack.c.l.b16 %v464
        %v597 = vunpack.c.l.b16 %v465
        %v598 = vunpack.c.l.b16 %v466
        %v599 = vunpack.c.l.b16 %v467
        %v600 = vunpack.c.l.b16 %v468
        %v601 = vunpack.c.l.b16 %v469
        %v602 = vunpack.c.l.b16 %v470
        %v603 = vunpack.c.l.b16 %v471
        %v604 = vunpack.c.l.b16 %v472
        %v605 = vpack.c.b16 %v590, %v589
        %v606 = vpack.c.b16 %v592, %v591
        %v607 = vpack.c.b16 %v594, %v593
        %v608 = vpack.c.b16 %v596, %v595
        %v609 = vpack.c.b16 %v598, %v597
        %v610 = vpack.c.b16 %v600, %v599
        %v611 = vpack.c.b16 %v602, %v601
        %v612 = vpack.c.b16 %v604, %v603
        %vm613 = vcmask 261120
        %v615 = vsel %vm613, %v605, 0
        %v618 = vsel %vm613, %v606, 0
        %v621 = vsel %vm613, %v607, 0
        %v624 = vsel %vm613, %v608, 0
        %v627 = vsel %vm613, %v609, 0
        %v630 = vsel %vm613, %v610, 0
        %v633 = vsel %vm613, %v611, 0
        %v636 = vsel %vm613, %v612, 0
        %638 = vmatpush.bf16.msra.mxu0 0
        %639 = vmatpush.bf16.msra.mxu0 0
        %640 = vmatpush.bf16.msra.mxu0 0
        %641 = vmatpush.bf16.msra.mxu0 0
        %642 = vmatpush.bf16.msra.mxu0 0
        %643 = vmatpush.bf16.msra.mxu0 0
        %644 = vmatpush.bf16.msra.mxu0 %v475
        %645 = vmatpush.bf16.msra.mxu0 %v473
        %646 = vmatmul.bf16.gmra.mxu0 %v615
        %v647 = vpop.f32.mrf.mxu0
        %v648 = vadd.f32 %v496, %v647
        %v649 = vpop.f32.mrf.mxu0
        %v650 = vadd.f32 %v501, %v649
        %651 = vmatmul.bf16.gmra.mxu0 %v618
        %v652 = vpop.f32.mrf.mxu0
        %v653 = vadd.f32 %v506, %v652
        %v654 = vpop.f32.mrf.mxu0
        %v655 = vadd.f32 %v511, %v654
        %656 = vmatmul.bf16.gmra.mxu0 %v621
        %v657 = vpop.f32.mrf.mxu0
        %v658 = vadd.f32 %v516, %v657
        %v659 = vpop.f32.mrf.mxu0
        %v660 = vadd.f32 %v521, %v659
        %661 = vmatmul.bf16.gmra.mxu0 %v624
        %v662 = vpop.f32.mrf.mxu0
        %v663 = vadd.f32 %v526, %v662
        %v664 = vpop.f32.mrf.mxu0
        %v665 = vadd.f32 %v531, %v664
        %666 = vmatmul.bf16.gmra.mxu0 %v627
        %v667 = vpop.f32.mrf.mxu0
        %v668 = vadd.f32 %v536, %v667
        %v669 = vpop.f32.mrf.mxu0
        %v670 = vadd.f32 %v541, %v669
        %671 = vmatmul.bf16.gmra.mxu0 %v630
        %v672 = vpop.f32.mrf.mxu0
        %v673 = vadd.f32 %v546, %v672
        %v674 = vpop.f32.mrf.mxu0
        %v675 = vadd.f32 %v551, %v674
        %676 = vmatmul.bf16.gmra.mxu0 %v633
        %v677 = vpop.f32.mrf.mxu0
        %v678 = vadd.f32 %v556, %v677
        %v679 = vpop.f32.mrf.mxu0
        %v680 = vadd.f32 %v561, %v679
        %681 = vmatmul.bf16.gmra.mxu0 %v636
        %v682 = vpop.f32.mrf.mxu0
        %v683 = vadd.f32 %v566, %v682
        %v684 = vpop.f32.mrf.mxu0
        %v685 = vadd.f32 %v571, %v684
        %686 = vdwg.mxu0
        %687 = vmatpush.bf16.msra.mxu0 0
        %688 = vmatpush.bf16.msra.mxu0 0
        %689 = vmatpush.bf16.msra.mxu0 0
        %690 = vmatpush.bf16.msra.mxu0 0
        %691 = vmatpush.bf16.msra.mxu0 0
        %692 = vmatpush.bf16.msra.mxu0 0
        %693 = vmatpush.bf16.msra.mxu0 %v476
        %694 = vmatpush.bf16.msra.mxu0 %v474
        %695 = vmatmul.bf16.gmra.mxu0 %v615
        %v696 = vpop.f32.mrf.mxu0
        %v697 = vadd.f32 %v496, %v696
        %v698 = vpop.f32.mrf.mxu0
        %v699 = vadd.f32 %v501, %v698
        %700 = vmatmul.bf16.gmra.mxu0 %v618
        %v701 = vpop.f32.mrf.mxu0
        %v702 = vadd.f32 %v506, %v701
        %v703 = vpop.f32.mrf.mxu0
        %v704 = vadd.f32 %v511, %v703
        %705 = vmatmul.bf16.gmra.mxu0 %v621
        %v706 = vpop.f32.mrf.mxu0
        %v707 = vadd.f32 %v516, %v706
        %v708 = vpop.f32.mrf.mxu0
        %v709 = vadd.f32 %v521, %v708
        %710 = vmatmul.bf16.gmra.mxu0 %v624
        %v711 = vpop.f32.mrf.mxu0
        %v712 = vadd.f32 %v526, %v711
        %v713 = vpop.f32.mrf.mxu0
        %v714 = vadd.f32 %v531, %v713
        %715 = vmatmul.bf16.gmra.mxu0 %v627
        %v716 = vpop.f32.mrf.mxu0
        %v717 = vadd.f32 %v536, %v716
        %v718 = vpop.f32.mrf.mxu0
        %v719 = vadd.f32 %v541, %v718
        %720 = vmatmul.bf16.gmra.mxu0 %v630
        %v721 = vpop.f32.mrf.mxu0
        %v722 = vadd.f32 %v546, %v721
        %v723 = vpop.f32.mrf.mxu0
        %v724 = vadd.f32 %v551, %v723
        %725 = vmatmul.bf16.gmra.mxu0 %v633
        %v726 = vpop.f32.mrf.mxu0
        %v727 = vadd.f32 %v556, %v726
        %v728 = vpop.f32.mrf.mxu0
        %v729 = vadd.f32 %v561, %v728
        %730 = vmatmul.bf16.gmra.mxu0 %v636
        %v731 = vpop.f32.mrf.mxu0
        %v732 = vadd.f32 %v566, %v731
        %v733 = vpop.f32.mrf.mxu0
        %v734 = vadd.f32 %v571, %v733
        %735 = vdwg.mxu0
        %v736 = vmax.f32 %v648, 0.0
        %v737 = vmax.f32 %v697, 0.0
        %v738 = vmax.f32 %v650, 0.0
        %v739 = vmax.f32 %v699, 0.0
        %v740 = vmax.f32 %v653, 0.0
        %v741 = vmax.f32 %v702, 0.0
        %v742 = vmax.f32 %v655, 0.0
        %v743 = vmax.f32 %v704, 0.0
        %v744 = vmax.f32 %v658, 0.0
        %v745 = vmax.f32 %v707, 0.0
        %v746 = vmax.f32 %v660, 0.0
        %v747 = vmax.f32 %v709, 0.0
        %v748 = vmax.f32 %v663, 0.0
        %v749 = vmax.f32 %v712, 0.0
        %v750 = vmax.f32 %v665, 0.0
        %v751 = vmax.f32 %v714, 0.0
        %v752 = vmax.f32 %v668, 0.0
        %v753 = vmax.f32 %v717, 0.0
        %v754 = vmax.f32 %v670, 0.0
        %v755 = vmax.f32 %v719, 0.0
        %v756 = vmax.f32 %v673, 0.0
        %v757 = vmax.f32 %v722, 0.0
        %v758 = vmax.f32 %v675, 0.0
        %v759 = vmax.f32 %v724, 0.0
        %v760 = vmax.f32 %v678, 0.0
        %v761 = vmax.f32 %v727, 0.0
        %v762 = vmax.f32 %v680, 0.0
        %v763 = vmax.f32 %v729, 0.0
        %v764 = vmax.f32 %v683, 0.0
        %v765 = vmax.f32 %v732, 0.0
        %v766 = vmax.f32 %v685, 0.0
        %v767 = vmax.f32 %v734, 0.0
        %v768 = vld [vmem:[%s4] sm:$0xf]
        %v769 = vld [vmem:[%s4 + $0x4] sm:$0xf]
        %v770 = vld [vmem:[%s4 + $0x8] sm:$0xf]
        %v771 = vld [vmem:[%s4 + $0xc] sm:$0xf]
        %v772 = vld [vmem:[%s4 + $0x10] sm:$0xf]
        %v773 = vld [vmem:[%s4 + $0x14] sm:$0xf]
        %v774 = vld [vmem:[%s4 + $0x18] sm:$0xf]
        %v775 = vld [vmem:[%s4 + $0x1c] sm:$0xf]
        %v776 = vld [vmem:[%s4 + $0x20] sm:$0xf]
        %v777 = vld [vmem:[%s4 + $0x24] sm:$0xf]
        %v778 = vld [vmem:[%s4 + $0x28] sm:$0xf]
        %v779 = vld [vmem:[%s4 + $0x2c] sm:$0xf]
        %v780 = vld [vmem:[%s4 + $0x30] sm:$0xf]
        %v781 = vld [vmem:[%s4 + $0x34] sm:$0xf]
        %v782 = vld [vmem:[%s4 + $0x38] sm:$0xf]
        %v783 = vld [vmem:[%s4 + $0x3c] sm:$0xf]
        %v784 = vpack.c.bf16 %v738, %v736
        %v785 = vpack.c.bf16 %v739, %v737
        %v786 = vpack.c.bf16 %v742, %v740
        %v787 = vpack.c.bf16 %v743, %v741
        %v788 = vpack.c.bf16 %v746, %v744
        %v789 = vpack.c.bf16 %v747, %v745
        %v790 = vpack.c.bf16 %v750, %v748
        %v791 = vpack.c.bf16 %v751, %v749
        %v792 = vpack.c.bf16 %v754, %v752
        %v793 = vpack.c.bf16 %v755, %v753
        %v794 = vpack.c.bf16 %v758, %v756
        %v795 = vpack.c.bf16 %v759, %v757
        %v796 = vpack.c.bf16 %v762, %v760
        %v797 = vpack.c.bf16 %v763, %v761
        %v798 = vpack.c.bf16 %v766, %v764
        %v799 = vpack.c.bf16 %v767, %v765
        %v800 = vld [vmem:[%s5] sm:$0xff]
        %v801 = vld [vmem:[%s5 + $0x8] sm:$0xff]
        %v802 = vld [vmem:[%s5 + $0x10] sm:$0xff]
        %v803 = vld [vmem:[%s5 + $0x18] sm:$0xff]
        %v804 = vld [vmem:[%s5 + $0x20] sm:$0xff]
        %v805 = vld [vmem:[%s5 + $0x28] sm:$0xff]
        %v806 = vld [vmem:[%s5 + $0x30] sm:$0xff]
        %v807 = vld [vmem:[%s5 + $0x38] sm:$0xff]
        %v808 = vld [vmem:[%s5 + $0x40] sm:$0xff]
        %v809 = vld [vmem:[%s5 + $0x48] sm:$0xff]
        %v810 = vld [vmem:[%s5 + $0x50] sm:$0xff]
        %v811 = vld [vmem:[%s5 + $0x58] sm:$0xff]
        %v812 = vld [vmem:[%s5 + $0x60] sm:$0xff]
        %v813 = vld [vmem:[%s5 + $0x68] sm:$0xff]
        %v814 = vld [vmem:[%s5 + $0x70] sm:$0xff]
        %v815 = vld [vmem:[%s5 + $0x78] sm:$0xff]
        %817 = vset.pattern.permute.xlu0 0
        %818 = vperm.xlu0 %817, %v800
        %v819 = vpop.permute.xlu0 %818
        %822 = vset.pattern.permute.xlu0 0
        %823 = vperm.xlu0 %822, %v801
        %v824 = vpop.permute.xlu0 %823
        %827 = vset.pattern.permute.xlu0 0
        %828 = vperm.xlu0 %827, %v802
        %v829 = vpop.permute.xlu0 %828
        %832 = vset.pattern.permute.xlu0 0
        %833 = vperm.xlu0 %832, %v803
        %v834 = vpop.permute.xlu0 %833
        %837 = vset.pattern.permute.xlu0 0
        %838 = vperm.xlu0 %837, %v804
        %v839 = vpop.permute.xlu0 %838
        %842 = vset.pattern.permute.xlu0 0
        %843 = vperm.xlu0 %842, %v805
        %v844 = vpop.permute.xlu0 %843
        %847 = vset.pattern.permute.xlu0 0
        %848 = vperm.xlu0 %847, %v806
        %v849 = vpop.permute.xlu0 %848
        %852 = vset.pattern.permute.xlu0 0
        %853 = vperm.xlu0 %852, %v807
        %v854 = vpop.permute.xlu0 %853
        %857 = vset.pattern.permute.xlu0 0
        %858 = vperm.xlu0 %857, %v808
        %v859 = vpop.permute.xlu0 %858
        %862 = vset.pattern.permute.xlu0 0
        %863 = vperm.xlu0 %862, %v809
        %v864 = vpop.permute.xlu0 %863
        %867 = vset.pattern.permute.xlu0 0
        %868 = vperm.xlu0 %867, %v810
        %v869 = vpop.permute.xlu0 %868
        %872 = vset.pattern.permute.xlu0 0
        %873 = vperm.xlu0 %872, %v811
        %v874 = vpop.permute.xlu0 %873
        %877 = vset.pattern.permute.xlu0 0
        %878 = vperm.xlu0 %877, %v812
        %v879 = vpop.permute.xlu0 %878
        %882 = vset.pattern.permute.xlu0 0
        %883 = vperm.xlu0 %882, %v813
        %v884 = vpop.permute.xlu0 %883
        %887 = vset.pattern.permute.xlu0 0
        %888 = vperm.xlu0 %887, %v814
        %v889 = vpop.permute.xlu0 %888
        %892 = vset.pattern.permute.xlu0 0
        %893 = vperm.xlu0 %892, %v815
        %v894 = vpop.permute.xlu0 %893
        %v912 = vunpack.c.l.b16 %v768
        %v913 = vunpack.c.l.b16 %v769
        %v914 = vunpack.c.l.b16 %v770
        %v915 = vunpack.c.l.b16 %v771
        %v916 = vunpack.c.l.b16 %v772
        %v917 = vunpack.c.l.b16 %v773
        %v918 = vunpack.c.l.b16 %v774
        %v919 = vunpack.c.l.b16 %v775
        %v920 = vunpack.c.l.b16 %v776
        %v921 = vunpack.c.l.b16 %v777
        %v922 = vunpack.c.l.b16 %v778
        %v923 = vunpack.c.l.b16 %v779
        %v924 = vunpack.c.l.b16 %v780
        %v925 = vunpack.c.l.b16 %v781
        %v926 = vunpack.c.l.b16 %v782
        %v927 = vunpack.c.l.b16 %v783
        %v928 = vpack.c.b16 %v913, %v912
        %v929 = vpack.c.b16 %v915, %v914
        %v930 = vpack.c.b16 %v917, %v916
        %v931 = vpack.c.b16 %v919, %v918
        %v932 = vpack.c.b16 %v921, %v920
        %v933 = vpack.c.b16 %v923, %v922
        %v934 = vpack.c.b16 %v925, %v924
        %v935 = vpack.c.b16 %v927, %v926
        %944 = vmatpush.bf16.msra.mxu0 %v798
        %945 = vmatpush.bf16.msra.mxu0 %v796
        %946 = vmatpush.bf16.msra.mxu0 %v794
        %947 = vmatpush.bf16.msra.mxu0 %v792
        %948 = vmatpush.bf16.msra.mxu0 %v790
        %949 = vmatpush.bf16.msra.mxu0 %v788
        %950 = vmatpush.bf16.msra.mxu0 %v786
        %951 = vmatpush.bf16.msra.mxu0 %v784
        %952 = vmatmul.bf16.gmra.mxu0 %v928
        %v953 = vpop.f32.mrf.mxu0
        %v954 = vadd.f32 %v819, %v953
        %v955 = vpop.f32.mrf.mxu0
        %v956 = vadd.f32 %v824, %v955
        %957 = vmatmul.bf16.gmra.mxu0 %v929
        %v958 = vpop.f32.mrf.mxu0
        %v959 = vadd.f32 %v829, %v958
        %v960 = vpop.f32.mrf.mxu0
        %v961 = vadd.f32 %v834, %v960
        %962 = vmatmul.bf16.gmra.mxu0 %v930
        %v963 = vpop.f32.mrf.mxu0
        %v964 = vadd.f32 %v839, %v963
        %v965 = vpop.f32.mrf.mxu0
        %v966 = vadd.f32 %v844, %v965
        %967 = vmatmul.bf16.gmra.mxu0 %v931
        %v968 = vpop.f32.mrf.mxu0
        %v969 = vadd.f32 %v849, %v968
        %v970 = vpop.f32.mrf.mxu0
        %v971 = vadd.f32 %v854, %v970
        %972 = vmatmul.bf16.gmra.mxu0 %v932
        %v973 = vpop.f32.mrf.mxu0
        %v974 = vadd.f32 %v859, %v973
        %v975 = vpop.f32.mrf.mxu0
        %v976 = vadd.f32 %v864, %v975
        %977 = vmatmul.bf16.gmra.mxu0 %v933
        %v978 = vpop.f32.mrf.mxu0
        %v979 = vadd.f32 %v869, %v978
        %v980 = vpop.f32.mrf.mxu0
        %v981 = vadd.f32 %v874, %v980
        %982 = vmatmul.bf16.gmra.mxu0 %v934
        %v983 = vpop.f32.mrf.mxu0
        %v984 = vadd.f32 %v879, %v983
        %v985 = vpop.f32.mrf.mxu0
        %v986 = vadd.f32 %v884, %v985
        %987 = vmatmul.bf16.gmra.mxu0 %v935
        %v988 = vpop.f32.mrf.mxu0
        %v989 = vadd.f32 %v889, %v988
        %v990 = vpop.f32.mrf.mxu0
        %v991 = vadd.f32 %v894, %v990
        %992 = vdwg.mxu0
        %993 = vmatpush.bf16.msra.mxu0 %v799
        %994 = vmatpush.bf16.msra.mxu0 %v797
        %995 = vmatpush.bf16.msra.mxu0 %v795
        %996 = vmatpush.bf16.msra.mxu0 %v793
        %997 = vmatpush.bf16.msra.mxu0 %v791
        %998 = vmatpush.bf16.msra.mxu0 %v789
        %999 = vmatpush.bf16.msra.mxu0 %v787
        %1000 = vmatpush.bf16.msra.mxu0 %v785
        %1001 = vmatmul.bf16.gmra.mxu0 %v928
        %v1002 = vpop.f32.mrf.mxu0
        %v1003 = vadd.f32 %v819, %v1002
        %v1004 = vpop.f32.mrf.mxu0
        %v1005 = vadd.f32 %v824, %v1004
        %1006 = vmatmul.bf16.gmra.mxu0 %v929
        %v1007 = vpop.f32.mrf.mxu0
        %v1008 = vadd.f32 %v829, %v1007
        %v1009 = vpop.f32.mrf.mxu0
        %v1010 = vadd.f32 %v834, %v1009
        %1011 = vmatmul.bf16.gmra.mxu0 %v930
        %v1012 = vpop.f32.mrf.mxu0
        %v1013 = vadd.f32 %v839, %v1012
        %v1014 = vpop.f32.mrf.mxu0
        %v1015 = vadd.f32 %v844, %v1014
        %1016 = vmatmul.bf16.gmra.mxu0 %v931
        %v1017 = vpop.f32.mrf.mxu0
        %v1018 = vadd.f32 %v849, %v1017
        %v1019 = vpop.f32.mrf.mxu0
        %v1020 = vadd.f32 %v854, %v1019
        %1021 = vmatmul.bf16.gmra.mxu0 %v932
        %v1022 = vpop.f32.mrf.mxu0
        %v1023 = vadd.f32 %v859, %v1022
        %v1024 = vpop.f32.mrf.mxu0
        %v1025 = vadd.f32 %v864, %v1024
        %1026 = vmatmul.bf16.gmra.mxu0 %v933
        %v1027 = vpop.f32.mrf.mxu0
        %v1028 = vadd.f32 %v869, %v1027
        %v1029 = vpop.f32.mrf.mxu0
        %v1030 = vadd.f32 %v874, %v1029
        %1031 = vmatmul.bf16.gmra.mxu0 %v934
        %v1032 = vpop.f32.mrf.mxu0
        %v1033 = vadd.f32 %v879, %v1032
        %v1034 = vpop.f32.mrf.mxu0
        %v1035 = vadd.f32 %v884, %v1034
        %1036 = vmatmul.bf16.gmra.mxu0 %v935
        %v1037 = vpop.f32.mrf.mxu0
        %v1038 = vadd.f32 %v889, %v1037
        %v1039 = vpop.f32.mrf.mxu0
        %v1040 = vadd.f32 %v894, %v1039
        %1041 = vdwg.mxu0
        %v1042 = vmax.f32 %v954, 0.0
        %v1043 = vmax.f32 %v1003, 0.0
        %v1044 = vmax.f32 %v956, 0.0
        %v1045 = vmax.f32 %v1005, 0.0
        %v1046 = vmax.f32 %v959, 0.0
        %v1047 = vmax.f32 %v1008, 0.0
        %v1048 = vmax.f32 %v961, 0.0
        %v1049 = vmax.f32 %v1010, 0.0
        %v1050 = vmax.f32 %v964, 0.0
        %v1051 = vmax.f32 %v1013, 0.0
        %v1052 = vmax.f32 %v966, 0.0
        %v1053 = vmax.f32 %v1015, 0.0
        %v1054 = vmax.f32 %v969, 0.0
        %v1055 = vmax.f32 %v1018, 0.0
        %v1056 = vmax.f32 %v971, 0.0
        %v1057 = vmax.f32 %v1020, 0.0
        %v1058 = vmax.f32 %v974, 0.0
        %v1059 = vmax.f32 %v1023, 0.0
        %v1060 = vmax.f32 %v976, 0.0
        %v1061 = vmax.f32 %v1025, 0.0
        %v1062 = vmax.f32 %v979, 0.0
        %v1063 = vmax.f32 %v1028, 0.0
        %v1064 = vmax.f32 %v981, 0.0
        %v1065 = vmax.f32 %v1030, 0.0
        %v1066 = vmax.f32 %v984, 0.0
        %v1067 = vmax.f32 %v1033, 0.0
        %v1068 = vmax.f32 %v986, 0.0
        %v1069 = vmax.f32 %v1035, 0.0
        %v1070 = vmax.f32 %v989, 0.0
        %v1071 = vmax.f32 %v1038, 0.0
        %v1072 = vmax.f32 %v991, 0.0
        %v1073 = vmax.f32 %v1040, 0.0
        %v1074 = vld [vmem:[%s6] sm:$0xff]
        %v1075 = vld [vmem:[%s6 + $0x8] sm:$0xff]
        %v1076 = vld [vmem:[%s6 + $0x10] sm:$0xff]
        %v1077 = vld [vmem:[%s6 + $0x18] sm:$0xff]
        %v1078 = vld [vmem:[%s6 + $0x20] sm:$0xff]
        %v1079 = vld [vmem:[%s6 + $0x28] sm:$0xff]
        %v1080 = vld [vmem:[%s6 + $0x30] sm:$0xff]
        %v1081 = vld [vmem:[%s6 + $0x38] sm:$0xff]
        %v1082 = vld [vmem:[%s6 + $0x40] sm:$0xff]
        %v1083 = vld [vmem:[%s6 + $0x48] sm:$0xff]
        %v1084 = vld [vmem:[%s6 + $0x50] sm:$0xff]
        %v1085 = vld [vmem:[%s6 + $0x58] sm:$0xff]
        %v1086 = vld [vmem:[%s6 + $0x60] sm:$0xff]
        %v1087 = vld [vmem:[%s6 + $0x68] sm:$0xff]
        %v1088 = vld [vmem:[%s6 + $0x70] sm:$0xff]
        %v1089 = vld [vmem:[%s6 + $0x78] sm:$0xff]
        %1091 = vset.pattern.permute.xlu0 0
        %1092 = vperm.xlu0 %1091, %v1074
        %v1093 = vpop.permute.xlu0 %1092
        %1096 = vset.pattern.permute.xlu0 0
        %1097 = vperm.xlu0 %1096, %v1075
        %v1098 = vpop.permute.xlu0 %1097
        %1101 = vset.pattern.permute.xlu0 0
        %1102 = vperm.xlu0 %1101, %v1076
        %v1103 = vpop.permute.xlu0 %1102
        %1106 = vset.pattern.permute.xlu0 0
        %1107 = vperm.xlu0 %1106, %v1077
        %v1108 = vpop.permute.xlu0 %1107
        %1111 = vset.pattern.permute.xlu0 0
        %1112 = vperm.xlu0 %1111, %v1078
        %v1113 = vpop.permute.xlu0 %1112
        %1116 = vset.pattern.permute.xlu0 0
        %1117 = vperm.xlu0 %1116, %v1079
        %v1118 = vpop.permute.xlu0 %1117
        %1121 = vset.pattern.permute.xlu0 0
        %1122 = vperm.xlu0 %1121, %v1080
        %v1123 = vpop.permute.xlu0 %1122
        %1126 = vset.pattern.permute.xlu0 0
        %1127 = vperm.xlu0 %1126, %v1081
        %v1128 = vpop.permute.xlu0 %1127
        %1131 = vset.pattern.permute.xlu0 0
        %1132 = vperm.xlu0 %1131, %v1082
        %v1133 = vpop.permute.xlu0 %1132
        %1136 = vset.pattern.permute.xlu0 0
        %1137 = vperm.xlu0 %1136, %v1083
        %v1138 = vpop.permute.xlu0 %1137
        %1141 = vset.pattern.permute.xlu0 0
        %1142 = vperm.xlu0 %1141, %v1084
        %v1143 = vpop.permute.xlu0 %1142
        %1146 = vset.pattern.permute.xlu0 0
        %1147 = vperm.xlu0 %1146, %v1085
        %v1148 = vpop.permute.xlu0 %1147
        %1151 = vset.pattern.permute.xlu0 0
        %1152 = vperm.xlu0 %1151, %v1086
        %v1153 = vpop.permute.xlu0 %1152
        %1156 = vset.pattern.permute.xlu0 0
        %1157 = vperm.xlu0 %1156, %v1087
        %v1158 = vpop.permute.xlu0 %1157
        %1161 = vset.pattern.permute.xlu0 0
        %1162 = vperm.xlu0 %1161, %v1088
        %v1163 = vpop.permute.xlu0 %1162
        %1166 = vset.pattern.permute.xlu0 0
        %1167 = vperm.xlu0 %1166, %v1089
        %v1168 = vpop.permute.xlu0 %1167
        %v1170 = vmul.f32 %v1042, %v1093
        %v1171 = vmul.f32 %v1043, %v1093
        %v1172 = vmul.f32 %v1044, %v1098
        %v1173 = vmul.f32 %v1045, %v1098
        %v1174 = vmul.f32 %v1046, %v1103
        %v1175 = vmul.f32 %v1047, %v1103
        %v1176 = vmul.f32 %v1048, %v1108
        %v1177 = vmul.f32 %v1049, %v1108
        %v1178 = vmul.f32 %v1050, %v1113
        %v1179 = vmul.f32 %v1051, %v1113
        %v1180 = vmul.f32 %v1052, %v1118
        %v1181 = vmul.f32 %v1053, %v1118
        %v1182 = vmul.f32 %v1054, %v1123
        %v1183 = vmul.f32 %v1055, %v1123
        %v1184 = vmul.f32 %v1056, %v1128
        %v1185 = vmul.f32 %v1057, %v1128
        %v1186 = vmul.f32 %v1058, %v1133
        %v1187 = vmul.f32 %v1059, %v1133
        %v1188 = vmul.f32 %v1060, %v1138
        %v1189 = vmul.f32 %v1061, %v1138
        %v1190 = vmul.f32 %v1062, %v1143
        %v1191 = vmul.f32 %v1063, %v1143
        %v1192 = vmul.f32 %v1064, %v1148
        %v1193 = vmul.f32 %v1065, %v1148
        %v1194 = vmul.f32 %v1066, %v1153
        %v1195 = vmul.f32 %v1067, %v1153
        %v1196 = vmul.f32 %v1068, %v1158
        %v1197 = vmul.f32 %v1069, %v1158
        %v1198 = vmul.f32 %v1070, %v1163
        %v1199 = vmul.f32 %v1071, %v1163
        %v1200 = vmul.f32 %v1072, %v1168
        %v1201 = vmul.f32 %v1073, %v1168
        %v1202 = vadd.f32 %v1170, %v1172
        %v1203 = vadd.f32 %v1202, %v1174
        %v1204 = vadd.f32 %v1203, %v1176
        %v1205 = vadd.f32 %v1204, %v1178
        %v1206 = vadd.f32 %v1205, %v1180
        %v1207 = vadd.f32 %v1206, %v1182
        %v1208 = vadd.f32 %v1207, %v1184
        %v1209 = vadd.f32 %v1208, %v1186
        %v1210 = vadd.f32 %v1209, %v1188
        %v1211 = vadd.f32 %v1210, %v1190
        %v1212 = vadd.f32 %v1211, %v1192
        %v1213 = vadd.f32 %v1212, %v1194
        %v1214 = vadd.f32 %v1213, %v1196
        %v1215 = vadd.f32 %v1214, %v1198
        %v1216 = vadd.f32 %v1215, %v1200
        %v1217 = vrot.slane %v1216, 4
        %v1218 = vadd.f32 %v1216, %v1217
        %v1219 = vrot.slane %v1218, 2
        %v1220 = vadd.f32 %v1218, %v1219
        %v1221 = vrot.slane %v1220, 1
        %v1222 = vadd.f32 %v1220, %v1221
        %v1223 = vadd.f32 %v1171, %v1173
        %v1224 = vadd.f32 %v1223, %v1175
        %v1225 = vadd.f32 %v1224, %v1177
        %v1226 = vadd.f32 %v1225, %v1179
        %v1227 = vadd.f32 %v1226, %v1181
        %v1228 = vadd.f32 %v1227, %v1183
        %v1229 = vadd.f32 %v1228, %v1185
        %v1230 = vadd.f32 %v1229, %v1187
        %v1231 = vadd.f32 %v1230, %v1189
        %v1232 = vadd.f32 %v1231, %v1191
        %v1233 = vadd.f32 %v1232, %v1193
        %v1234 = vadd.f32 %v1233, %v1195
        %v1235 = vadd.f32 %v1234, %v1197
        %v1236 = vadd.f32 %v1235, %v1199
        %v1237 = vadd.f32 %v1236, %v1201
        %v1238 = vrot.slane %v1237, 4
        %v1239 = vadd.f32 %v1237, %v1238
        %v1240 = vrot.slane %v1239, 2
        %v1241 = vadd.f32 %v1239, %v1240
        %v1242 = vrot.slane %v1241, 1
        %v1243 = vadd.f32 %v1241, %v1242
        %s1244 = sld [smem:[#allocation2]]
        %v1245 = vstv %s1244
        %v1246 = vadd.f32 %v1222, %v1245
        %v1247 = vadd.f32 %v1243, %v1245
        %v1250 = vrot.slane %v1247, 7
        %vm1251 = vcmask 1040384
        %v1252 = vsel %vm1251, %v1246, %v1250
        %v1254 = vlaneseq
        %vm1255 = vcmp.ge.s32.totalorder %v1254, 0
        %vm1256 = vcmp.lt.s32.totalorder %v1254, 256
        %vm1257 = vmand %vm1255, %vm1256
        %1258 = vst.msk [vmem:[%s420] sm:$0x3] %vm1257, %v1252
        %s1259 = sand.u32 %s209, 1
        %s1260 = scalar_lea.sflag [#allocation6], %s1259
        %s1261 = sand.u32 %s209, 1
        %s1262 = smul.addr %s1261, 2
        %s1263 = scalar_lea.vmem [#allocation5], %s1262
        // Predicated region
        $region129: #{tpu_custom_call.1} parent=119 // pred_check
          %p1264 = pneg %p219
        $region130: #{tpu_custom_call.1} parent=119 // pred_check_branch
          %1266 = sbr.rel (%p1264) target = $region132
        $region131: #{tpu_custom_call.1} parent=119 // pred_region
          %s1267 = smul.u32 2, %s23
          %1269 = vsyncadd %s1260, 0
          %s1270 = scalar_lea.hbm %s8, %s1267
          %s1272 = sshll.u32 %s1263, 4
          %s1273 = int_to_ptr.vmem [resolvable:$true] %s1272
          %s1274 = sshll.u32 %s1270, 4
          %s1275 = int_to_ptr.hbm [resolvable:$true] %s1274
          %1277 = dma.vmem_to_hbm [thread:$0]  %s1273, 32, %s1275, %s1260
        $region132: #{tpu_custom_call.1} parent=119 // pred_fallthru
          _
      $region120: #{tpu_custom_call.1} parent=5 // pred_fallthru
        _
      %p1278 = scmp.le.s32.totalorder 2, %s18
      // Predicated region
      $region133: #{tpu_custom_call.1} parent=5 // pred_check
        %p1279 = pneg %p1278
      $region134: #{tpu_custom_call.1} parent=5 // pred_check_branch
        %1281 = sbr.rel (%p1279) target = $region136
      $region135: #{tpu_custom_call.1} parent=5 // pred_region
        %s1282 = ssub.s32 %s18, 2
        // Predicated region
        $region137: #{tpu_custom_call.1} parent=135 // pred_check
          %p1283 = pneg %p225
        $region138: #{tpu_custom_call.1} parent=135 // pred_check_branch
          %1285 = sbr.rel (%p1283) target = $region140
        $region139: #{tpu_custom_call.1} parent=135 // pred_region
          %s1286 = sand.u32 %s210, 1
          %s1287 = scalar_lea.sflag [#allocation6], %s1286
          %s1288 = sand.u32 %s210, 1
          %s1289 = smul.addr %s1288, 2
          %s1290 = scalar_lea.vmem [#allocation5], %s1289
          %1292 = dma.done %s1287, 32
        $region140: #{tpu_custom_call.1} parent=135 // pred_fallthru
          _
      $region136: #{tpu_custom_call.1} parent=5 // pred_fallthru
        _
    $region6: #{tpu_custom_call.1} parent=1 // loop_footer
      %s22 = sadd.s32 1, %s18
    $region7: #{tpu_custom_call.1} parent=1 // loop_footer_branch
      %17 = sbr.rel target = $region3
    $region8: #{tpu_custom_call.1} parent=1 // loop_exit
      _
    %1293 = vsyncpa [#allocation6], 1
    %s1294 = scalar_lea.sflag [#allocation6], 1
    %1295 = vsyncpa %s1294, 1

</llo_original>
